<compile_context>
chip_gen: v7x
topology: tpu7x:2x2x1
jax: 0.10.0
libtpu: 0.0.40
codegen_flags: <defaults>
</compile_context>

<pallas_src>
import math

import numpy as np

import jax
import jax.numpy as jnp
from jax import lax
from jax.experimental import pallas as pl
from jax.experimental.pallas import tpu as pltpu


def _round_up(v, m):
    return -(-v // m) * m


def _vmem_bytes(shape, itemsize):
    """Approximate VMEM footprint of a block (lane dim padded to 128, sublane to 8)."""
    s = list(shape)
    s[-1] = _round_up(s[-1], 128)
    if len(s) >= 2:
        s[-2] = _round_up(s[-2], 8)
    n = 1
    for d in s:
        n *= d
    return n * itemsize


def _grouped_lora_kernel(group_task_ref,  # [n_groups] int32 SMEM (scalar prefetch; used by index_maps)
                         x_ref,           # (tm, tk)    bf16  VMEM (rows of one task group)
                         w_ref,           # (tk, tn)    bf16  VMEM
                         bias_ref,        # (1, tn)     f32   VMEM
                         a_ref,           # (1, r, tk)  bf16  VMEM (group's adapter A, lane-dense)
                         b_ref,           # (1, r, tn)  bf16  VMEM (group's adapter B, pre-scaled)
                         out_ref,         # (tm, tn)          VMEM
                         acc_ref,         # (tm, tn)    f32   VMEM scratch (base accumulator)
                         h_ref):          # (tm, r)     f32   VMEM scratch (LoRA down-proj)
    n = pl.program_id(1)
    k = pl.program_id(2)
    nk = pl.num_programs(2)

    @pl.when(k == 0)
    def _init():
        # Fold the bias add into the accumulator init.
        acc_ref[...] = jnp.broadcast_to(bias_ref[...], acc_ref.shape)

    x = x_ref[...]                                              # (tm, tk) bf16

    # Base-path partial product on the MXU, f32 accumulation.
    acc_ref[...] += jnp.dot(x, w_ref[...],
                            preferred_element_type=jnp.float32)

    # LoRA down-projection: computed once per row group (first N tile only);
    # h_ref persists across the N sweep.  Requires the N axis NOT to be
    # megacore-parallel (see dimension_semantics below).
    @pl.when(n == 0)
    def _lora_down():
        @pl.when(k == 0)
        def _hzero():
            h_ref[...] = jnp.zeros_like(h_ref)

        h_ref[...] += lax.dot_general(
            x, a_ref[0],
            dimension_numbers=(((1,), (1,)), ((), ())),
            preferred_element_type=jnp.float32)                 # (tm, r)

    @pl.when(k == nk - 1)
    def _finalize():
        # LoRA up-projection on the bf16 MXU path (B already scaled by `scaling`).
        lora = jnp.dot(h_ref[...].astype(jnp.bfloat16), b_ref[0],
                       preferred_element_type=jnp.float32)      # (tm, tn)
        out_ref[...] = (acc_ref[...] + lora).astype(out_ref.dtype)


def multi_adapter_linear(x, task_ids, base_w_t, base_bias,
                         lora_a_lane, lora_b_scaled,
                         *, tile_m=256, tile_n=256, tile_k=256):
    """x: [B, S, Din]; task_ids: host int array [B]; base_w_t: [Din, Dout];
    base_bias: [Dout]; lora_a_lane: [T, r, Din] (lane-dense A layout);
    lora_b_scaled: [T, r, Dout] (= W_B^T per task, pre-multiplied by scaling)."""
    B, S, Din = x.shape
    Dout = base_w_t.shape[1]
    T, r, _ = lora_a_lane.shape
    M = B * S

    tn = min(tile_n, Dout)
    tk = min(tile_k, Din)
    tm = min(tile_m, _round_up(M, 8))
    assert Din % tk == 0 and Dout % tn == 0, "Din/Dout must be multiples of the tile sizes"
    nk = Din // tk
    n_tiles = Dout // tn

    # ---- Host-side MoE-style grouping of rows by task id (mirrors the module's
    #      Python loop over `task_label`, which is a host-side list of strings).
    task_ids_np = np.asarray(task_ids, dtype=np.int32).reshape(B)
    row_task = np.repeat(task_ids_np, S)                        # [M]
    gather_chunks, group_task = [], []
    for t in range(T):
        rows = np.nonzero(row_task == t)[0]
        if rows.size == 0:
            continue
        n_blocks = -(-rows.size // tm)
        pad = n_blocks * tm - rows.size
        rows = np.concatenate([rows, np.full((pad,), -1, dtype=rows.dtype)])
        gather_chunks.append(rows)
        group_task += [t] * n_blocks
    gather_rows = np.concatenate(gather_chunks)                 # [M_pad]
    group_task = np.asarray(group_task, dtype=np.int32)         # [n_groups]
    M_pad = int(gather_rows.shape[0])
    n_groups = int(group_task.shape[0])

    safe_rows = np.where(gather_rows < 0, 0, gather_rows).astype(np.int32)
    valid = gather_rows >= 0
    inv = np.zeros((M,), dtype=np.int32)
    inv[gather_rows[valid]] = np.nonzero(valid)[0]              # grouped -> original rows

    # bf16 matmul operands; f32 accumulation inside the kernel.
    xg = x.reshape(M, Din)[jnp.asarray(safe_rows)].astype(jnp.bfloat16)   # [M_pad, Din]
    wb = base_w_t.astype(jnp.bfloat16)
    ab = lora_a_lane.astype(jnp.bfloat16)
    bb = lora_b_scaled.astype(jnp.bfloat16)
    bias2d = base_bias.reshape(1, Dout).astype(jnp.float32)
    group_task_dev = jnp.asarray(group_task)

    grid_spec = pltpu.PrefetchScalarGridSpec(
        num_scalar_prefetch=1,
        grid=(n_groups, n_tiles, nk),
        in_specs=[
            pl.BlockSpec((tm, tk), lambda m, n, k, gt: (m, k)),            # grouped x rows
            pl.BlockSpec((tk, tn), lambda m, n, k, gt: (k, n)),            # W^T tile (task-independent)
            pl.BlockSpec((1, tn), lambda m, n, k, gt: (0, n)),             # bias tile
            pl.BlockSpec((1, r, tk), lambda m, n, k, gt: (gt[m], 0, k)),   # A_group (lane-dense)
            pl.BlockSpec((1, r, tn), lambda m, n, k, gt: (gt[m], 0, n)),   # B_group (pre-scaled)
        ],
        out_specs=pl.BlockSpec((tm, tn), lambda m, n, k, gt: (m, n)),
        scratch_shapes=[
            pltpu.VMEM((tm, tn), jnp.float32),   # base-path accumulator (K-resident)
            pltpu.VMEM((tm, r), jnp.float32),    # LoRA h (resident across the N, K sweeps)
        ],
    )

    out_dt = x.dtype
    out_itemsize = jnp.dtype(out_dt).itemsize

    # Exact VMEM budget (double-buffered pipeline blocks + scratch) + ~25%
    # headroom; floor keeps the pipeliner comfortable, cap stays well under
    # v7x's 64 MiB per-TensorCore VMEM.
    tile_bytes = 2 * (_vmem_bytes((tm, tk), 2) + _vmem_bytes((tk, tn), 2)
                      + _vmem_bytes((1, tn), 4)
                      + _vmem_bytes((1, r, tk), 2) + _vmem_bytes((1, r, tn), 2)
                      + _vmem_bytes((tm, tn), out_itemsize))
    scratch_bytes = _vmem_bytes((tm, tn), 4) + _vmem_bytes((tm, r), 4)
    vmem_limit = int(min(48 * 1024 * 1024,
                         max(16 * 1024 * 1024,
                             int(1.25 * (tile_bytes + scratch_bytes)))))

    flops = (2 * M_pad * Din * Dout              # base matmul
             + 2 * M_pad * Din * r               # LoRA down-proj (once per row group)
             + 2 * M_pad * r * Dout)             # LoRA up-proj
    bytes_accessed = (n_tiles * M_pad * Din * 2              # x (re-read once per N tile)
                      + n_groups * Din * Dout * 2            # W^T (re-read once per row group)
                      + n_groups * n_tiles * nk * r * (tk + tn) * 2   # adapter tiles
                      + Dout * 4                              # bias
                      + M_pad * Dout * out_itemsize)          # output writeback

    out_grouped = pl.pallas_call(
        _grouped_lora_kernel,
        out_shape=jax.ShapeDtypeStruct((M_pad, Dout), out_dt),
        grid_spec=grid_spec,
        compiler_params=pltpu.CompilerParams(
            # Only the row-group axis is megacore-parallel: the N axis reuses
            # the per-core h scratch across tiles, so it must stay on one core.
            dimension_semantics=("parallel", "arbitrary", "arbitrary"),
            vmem_limit_bytes=vmem_limit),
        cost_estimate=pl.CostEstimate(
            flops=int(flops), transcendentals=0,
            bytes_accessed=int(bytes_accessed)),
    )(group_task_dev, xg, wb, bias2d, ab, bb)

    # Un-scatter the grouped rows back to (B, S, Dout); padded rows are dropped.
    return out_grouped[jnp.asarray(inv)].reshape(B, S, Dout)


def reference(x, task_ids, base_w_t, base_bias, lora_a_lane, lora_b_scaled):
    # Pure-JAX reference matching the kernel numerics (bf16 operands, f32 acc,
    # h re-quantized to bf16 before the up-projection).
    f32 = jnp.float32
    xb = x.astype(jnp.bfloat16).astype(f32)
    wb = base_w_t.astype(jnp.bfloat16).astype(f32)
    ab = lora_a_lane.astype(jnp.bfloat16).astype(f32)
    bb = lora_b_scaled.astype(jnp.bfloat16).astype(f32)
    base = jnp.einsum("bsd,do->bso", xb, wb,
                      preferred_element_type=f32) + base_bias[None, None, :]
    tid = jnp.asarray(np.asarray(task_ids, dtype=np.int32))
    a_sel = ab[tid]                         # (B, r, Din)
    b_sel = bb[tid]                         # (B, r, Dout)
    h = jnp.einsum("bsd,brd->bsr", xb, a_sel, preferred_element_type=f32)
    h = h.astype(jnp.bfloat16).astype(f32)
    lora = jnp.einsum("bsr,bro->bso", h, b_sel, preferred_element_type=f32)
    return (base + lora).astype(x.dtype)


if __name__ == "__main__":
    # Module hyper-params (mirrors __init__ shapes of MultiAdapterLinear)
    in_features = 512
    out_features = 512
    r = 8
    lora_alpha = 16
    scaling = lora_alpha / r          # use_rslora=False branch
    task_names = ["taskA", "taskB", "taskC"]
    num_tasks = len(task_names)

    batch, seq = 4, 16

    key = jax.random.PRNGKey(0)
    kx, kw, kb, ka, kB = jax.random.split(key, 5)

    x = jax.random.normal(kx, (batch, seq, in_features), dtype=jnp.float32)

    # Base nn.Linear(in_features, out_features): weight [out, in], bias [out].
    # Stored transposed ([in, out]) for the kernel.
    base_w = jax.random.normal(kw, (out_features, in_features), jnp.float32) * (
        1.0 / math.sqrt(in_features))
    base_w_t = base_w.T
    base_bias = jax.random.normal(kb, (out_features,), jnp.float32) * 0.1

    # lora_A[task]: nn.Linear(in_features, r) -> weight [r, in]; kept lane-dense
    # as [T, r, in] (Din on the 128-lane axis).
    lora_a = jax.random.normal(ka, (num_tasks, r, in_features), jnp.float32) * (
        1.0 / math.sqrt(in_features))
    # lora_B[task]: nn.Linear(r, out_features) -> weight [out, r]; stored as
    # [T, r, out] and pre-scaled by `scaling`.  NOTE: PEFT inits B to zeros;
    # use small non-zero values so the LoRA path is actually exercised.
    lora_b = jax.random.normal(kB, (num_tasks, out_features, r), jnp.float32) * 0.05
    lora_b_scaled = jnp.transpose(lora_b, (0, 2, 1)) * scaling

    # Per-example task labels (the list-of-strings branch), mapped to int ids.
    task_label = ["taskB", "taskA", "taskC", "taskB"]
    name_to_id = {n: i for i, n in enumerate(task_names)}
    task_ids = np.array([name_to_id[t] for t in task_label], dtype=np.int32)

    out = multi_adapter_linear(x, task_ids, base_w_t, base_bias,
                               lora_a, lora_b_scaled)
    out = jax.block_until_ready(out)

    ref = reference(x, task_ids, base_w_t, base_bias, lora_a, lora_b_scaled)
    assert out.shape == (batch, seq, out_features)
    max_err = float(jnp.max(jnp.abs(out - ref)))
    assert jnp.allclose(out, ref, atol=5e-3, rtol=5e-3), max_err

    print("KERNEL_OK")
</pallas_src>

<mosaic_0001>
module attributes {stable_mosaic.version = 11 : i64} {
  func.func @_grouped_lora_kernel(%arg0: i32, %arg1: i32, %arg2: i32, %arg3: memref<3xi32, #tpu.memory_space<smem>>, %arg4: memref<64x256xbf16, #tpu.memory_space<vmem>>, %arg5: memref<256x256xbf16, #tpu.memory_space<vmem>>, %arg6: memref<1x256xf32, #tpu.memory_space<vmem>>, %arg7: memref<1x8x256xbf16, #tpu.memory_space<vmem>>, %arg8: memref<1x8x256xbf16, #tpu.memory_space<vmem>>, %arg9: memref<64x256xf32, #tpu.memory_space<vmem>>, %arg10: memref<64x256xf32, #tpu.memory_space<vmem>>, %arg11: memref<64x8xf32, #tpu.memory_space<vmem>>) attributes {dimension_semantics = [#tpu.dimension_semantics<parallel>, #tpu.dimension_semantics<arbitrary>, #tpu.dimension_semantics<arbitrary>], iteration_bounds = array<i64: 3, 2, 2>, scalar_prefetch = 1 : i64, scratch_operands = 2 : i64, tpu.core_type = #tpu.core_type<tc>, window_params = [{transform_indices = @transform_0, window_bounds = array<i64: 64, 256>}, {transform_indices = @transform_1, window_bounds = array<i64: 256, 256>}, {transform_indices = @transform_2, window_bounds = array<i64: 1, 256>}, {transform_indices = @transform_3, window_bounds = array<i64: 1, 8, 256>}, {transform_indices = @transform_4, window_bounds = array<i64: 1, 8, 256>}, {transform_indices = @transform_5, window_bounds = array<i64: 64, 256>}]} {
    %c0_i32 = arith.constant 0 : i32
    %0 = arith.cmpi eq, %arg2, %c0_i32 : i32
    %1 = arith.extui %0 : i1 to i32
    %c0_i32_0 = arith.constant 0 : i32
    %2 = arith.cmpi ne, %1, %c0_i32_0 : i32
    scf.if %2 {
      %c0_11 = arith.constant 0 : index
      %c0_12 = arith.constant 0 : index
      %15 = vector.load %arg6[%c0_11, %c0_12] : memref<1x256xf32, #tpu.memory_space<vmem>>, vector<1x256xf32>
      %16 = vector.shape_cast %15 : vector<1x256xf32> to vector<1x256xf32>
      %17 = vector.broadcast %16 : vector<1x256xf32> to vector<64x256xf32>
      %c0_13 = arith.constant 0 : index
      %c0_14 = arith.constant 0 : index
      %18 = vector.load %arg10[%c0_13, %c0_14] : memref<64x256xf32, #tpu.memory_space<vmem>>, vector<64x256xf32>
      tpu.vector_store %arg10[%c0_13, %c0_14], %17 {strides = array<i32>} : memref<64x256xf32, #tpu.memory_space<vmem>>, vector<64x256xf32>,
    } else {
    }
    %c0 = arith.constant 0 : index
    %c0_1 = arith.constant 0 : index
    %3 = vector.load %arg4[%c0, %c0_1] : memref<64x256xbf16, #tpu.memory_space<vmem>>, vector<64x256xbf16>
    %c0_2 = arith.constant 0 : index
    %c0_3 = arith.constant 0 : index
    %4 = vector.load %arg10[%c0_2, %c0_3] : memref<64x256xf32, #tpu.memory_space<vmem>>, vector<64x256xf32>
    %c0_4 = arith.constant 0 : index
    %c0_5 = arith.constant 0 : index
    %5 = vector.load %arg5[%c0_4, %c0_5] : memref<256x256xbf16, #tpu.memory_space<vmem>>, vector<256x256xbf16>
    %cst = arith.constant dense<0.000000e+00> : vector<64x256xf32>
    %6 = tpu.matmul %3, %5, %cst {dimension_numbers = #tpu.dot_dimension_numbers<[1], [0], [0], [1], [0, 0, 1, 1], [], []>} : vector<64x256xbf16>, vector<256x256xbf16>, vector<64x256xf32> -> vector<64x256xf32>
    %7 = arith.addf %4, %6 : vector<64x256xf32>
    %c0_6 = arith.constant 0 : index
    %c0_7 = arith.constant 0 : index
    %8 = vector.load %arg10[%c0_6, %c0_7] : memref<64x256xf32, #tpu.memory_space<vmem>>, vector<64x256xf32>
    tpu.vector_store %arg10[%c0_6, %c0_7], %7 {strides = array<i32>} : memref<64x256xf32, #tpu.memory_space<vmem>>, vector<64x256xf32>,
    %c0_i32_8 = arith.constant 0 : i32
    %9 = arith.cmpi eq, %arg1, %c0_i32_8 : i32
    %10 = arith.extui %9 : i1 to i32
    %c0_i32_9 = arith.constant 0 : i32
    %11 = arith.cmpi ne, %10, %c0_i32_9 : i32
    scf.if %11 {
      %c0_i32_11 = arith.constant 0 : i32
      %15 = arith.cmpi eq, %arg2, %c0_i32_11 : i32
      %16 = arith.extui %15 : i1 to i32
      %c0_i32_12 = arith.constant 0 : i32
      %17 = arith.cmpi ne, %16, %c0_i32_12 : i32
      scf.if %17 {
        %cst_21 = arith.constant 0.000000e+00 : f32
        %24 = vector.broadcast %cst_21 : f32 to vector<64x8xf32>
        %c0_22 = arith.constant 0 : index
        %c0_23 = arith.constant 0 : index
        %25 = vector.load %arg11[%c0_22, %c0_23] : memref<64x8xf32, #tpu.memory_space<vmem>>, vector<64x8xf32>
        tpu.vector_store %arg11[%c0_22, %c0_23], %24 {strides = array<i32>} : memref<64x8xf32, #tpu.memory_space<vmem>>, vector<64x8xf32>,
      } else {
      }
      %c0_13 = arith.constant 0 : index
      %c0_14 = arith.constant 0 : index
      %18 = vector.load %arg11[%c0_13, %c0_14] : memref<64x8xf32, #tpu.memory_space<vmem>>, vector<64x8xf32>
      %c0_15 = arith.constant 0 : index
      %c0_16 = arith.constant 0 : index
      %c0_17 = arith.constant 0 : index
      %19 = vector.load %arg7[%c0_15, %c0_16, %c0_17] : memref<1x8x256xbf16, #tpu.memory_space<vmem>>, vector<1x8x256xbf16>
      %20 = vector.shape_cast %19 : vector<1x8x256xbf16> to vector<8x256xbf16>
      %cst_18 = arith.constant dense<0.000000e+00> : vector<64x8xf32>
      %21 = tpu.matmul %3, %20, %cst_18 {dimension_numbers = #tpu.dot_dimension_numbers<[1], [1], [0], [0], [0, 0, 1, 0], [], []>} : vector<64x256xbf16>, vector<8x256xbf16>, vector<64x8xf32> -> vector<64x8xf32>
      %22 = arith.addf %18, %21 : vector<64x8xf32>
      %c0_19 = arith.constant 0 : index
      %c0_20 = arith.constant 0 : index
      %23 = vector.load %arg11[%c0_19, %c0_20] : memref<64x8xf32, #tpu.memory_space<vmem>>, vector<64x8xf32>
      tpu.vector_store %arg11[%c0_19, %c0_20], %22 {strides = array<i32>} : memref<64x8xf32, #tpu.memory_space<vmem>>, vector<64x8xf32>,
    } else {
    }
    %c1_i32 = arith.constant 1 : i32
    %12 = arith.cmpi eq, %arg2, %c1_i32 : i32
    %13 = arith.extui %12 : i1 to i32
    %c0_i32_10 = arith.constant 0 : i32
    %14 = arith.cmpi ne, %13, %c0_i32_10 : i32
    scf.if %14 {
      %c0_11 = arith.constant 0 : index
      %c0_12 = arith.constant 0 : index
      %15 = vector.load %arg11[%c0_11, %c0_12] : memref<64x8xf32, #tpu.memory_space<vmem>>, vector<64x8xf32>
      %16 = arith.truncf %15 : vector<64x8xf32> to vector<64x8xbf16>
      %c0_13 = arith.constant 0 : index
      %c0_14 = arith.constant 0 : index
      %c0_15 = arith.constant 0 : index
      %17 = vector.load %arg8[%c0_13, %c0_14, %c0_15] : memref<1x8x256xbf16, #tpu.memory_space<vmem>>, vector<1x8x256xbf16>
      %18 = vector.shape_cast %17 : vector<1x8x256xbf16> to vector<8x256xbf16>
      %cst_16 = arith.constant dense<0.000000e+00> : vector<64x256xf32>
      %19 = tpu.matmul %16, %18, %cst_16 {dimension_numbers = #tpu.dot_dimension_numbers<[1], [0], [0], [1], [0, 0, 1, 1], [], []>} : vector<64x8xbf16>, vector<8x256xbf16>, vector<64x256xf32> -> vector<64x256xf32>
      %c0_17 = arith.constant 0 : index
      %c0_18 = arith.constant 0 : index
      %20 = vector.load %arg10[%c0_17, %c0_18] : memref<64x256xf32, #tpu.memory_space<vmem>>, vector<64x256xf32>
      %21 = arith.addf %20, %19 : vector<64x256xf32>
      %c0_19 = arith.constant 0 : index
      %c0_20 = arith.constant 0 : index
      %22 = vector.load %arg9[%c0_19, %c0_20] : memref<64x256xf32, #tpu.memory_space<vmem>>, vector<64x256xf32>
      tpu.vector_store %arg9[%c0_19, %c0_20], %21 {strides = array<i32>} : memref<64x256xf32, #tpu.memory_space<vmem>>, vector<64x256xf32>,
    } else {
    }
    return
  }
  func.func @transform_0(%arg0: i32, %arg1: i32, %arg2: i32, %arg3: memref<3xi32, #tpu.memory_space<smem>>) -> (i32, i32) {
    %c0_i32 = arith.constant 0 : i32
    return %arg0, %arg2 : i32, i32
  }
  func.func @transform_1(%arg0: i32, %arg1: i32, %arg2: i32, %arg3: memref<3xi32, #tpu.memory_space<smem>>) -> (i32, i32) {
    %c0_i32 = arith.constant 0 : i32
    return %arg2, %arg1 : i32, i32
  }
  func.func @transform_2(%arg0: i32, %arg1: i32, %arg2: i32, %arg3: memref<3xi32, #tpu.memory_space<smem>>) -> (i32, i32) {
    %c0_i32 = arith.constant 0 : i32
    %c0_i32_0 = arith.constant 0 : i32
    return %c0_i32, %arg1 : i32, i32
  }
  func.func @transform_3(%arg0: i32, %arg1: i32, %arg2: i32, %arg3: memref<3xi32, #tpu.memory_space<smem>>) -> (i32, i32, i32) {
    %0 = arith.index_cast %arg0 : i32 to index
    %1 = memref.load %arg3[%0] : memref<3xi32, #tpu.memory_space<smem>>
    %c0_i32 = arith.constant 0 : i32
    %c0_i32_0 = arith.constant 0 : i32
    return %1, %c0_i32, %arg2 : i32, i32, i32
  }
  func.func @transform_4(%arg0: i32, %arg1: i32, %arg2: i32, %arg3: memref<3xi32, #tpu.memory_space<smem>>) -> (i32, i32, i32) {
    %0 = arith.index_cast %arg0 : i32 to index
    %1 = memref.load %arg3[%0] : memref<3xi32, #tpu.memory_space<smem>>
    %c0_i32 = arith.constant 0 : i32
    %c0_i32_0 = arith.constant 0 : i32
    return %1, %c0_i32, %arg1 : i32, i32, i32
  }
  func.func @transform_5(%arg0: i32, %arg1: i32, %arg2: i32, %arg3: memref<3xi32, #tpu.memory_space<smem>>) -> (i32, i32) {
    %c0_i32 = arith.constant 0 : i32
    return %arg0, %arg1 : i32, i32
  }
}

</mosaic_0001>

<llo_original>
// kernel: tpu_custom_call.1
$region0: #{tpu_custom_call.1}
  #allocation0 [shape = 'u32[]', space=smem, size = 0x4, offset = 0x4, fixed_abs, tag = 'smem constant byte address 0x4 - core index']
  #allocation1 [shape = 'u32[144,128]{1,0:T(1,128)}', space=vmem, size = 0x12000, scoped, tag = 'internal scratch']
  #allocation2 [shape = 'f32[64,256]{1,0:T(8,128)}', space=vmem, size = 0x10000, scoped, tag = 'scratch operand']
  #allocation3 [shape = 'f32[64,8]{1,0:T(8,128)}', space=vmem, size = 0x8000, scoped, tag = 'scratch operand']
  #allocation4 [shape = 's32[1]{0}', space=sflag, size = 0x4, scoped, tag = 'scoped memory for tpu_custom_call.1']
  #allocation5 [shape = 'u8[512]{0}', space=smem, size = 0x200, scoped, tag = 'prefetched SMEM operand 0']
  %s0 = inlined_call_operand.hbm [shape: s32[3], index: 0, kind: input, shape index: {}]
  %s1 = inlined_call_operand.hbm [shape: bf16[192,512], index: 1, kind: input, shape index: {}]
  %s2 = inlined_call_operand.hbm [shape: bf16[512,512], index: 2, kind: input, shape index: {}]
  %s3 = inlined_call_operand.vmem [shape: f32[1,512], index: 3, kind: input, shape index: {}]
  %s4 = inlined_call_operand.hbm [shape: bf16[3,8,512], index: 4, kind: input, shape index: {}]
  %s5 = inlined_call_operand.hbm [shape: bf16[3,8,512], index: 5, kind: input, shape index: {}]
  %s6 = inlined_call_operand.hbm [shape: f32[192,512], index: 6, kind: output, shape index: {}]
  %s7 = sld [smem:[#allocation0]]
  $region85: #{tpu_custom_call.1} parent=0
    _
  %s9 = ssub.s32 1, %s7
  %s10 = scalar_select 0, %s9, %s7
  %12 = dma.hbm_to_smem %s0, 16, [#allocation5], [#allocation4]
  %13 = dma.done [#allocation4], 16
  %14 = sfence
  $region1: #{tpu_custom_call.1} parent=0
    #allocation6 [shape = 'u8[65536]{0}', space=vmem, size = 0x10000, scoped, tag = 'input window, operand 1']
    #allocation7 [shape = 's32[2]{0}', space=sflag, size = 0x8, scoped, tag = 'scoped memory for tpu_custom_call.1']
    #allocation8 [shape = 's32[2]{0}', space=sflag, size = 0x8, scoped, tag = 'scoped memory for tpu_custom_call.1']
    #allocation9 [shape = 'u8[262144]{0}', space=vmem, size = 0x40000, scoped, tag = 'input window, operand 2']
    #allocation10 [shape = 's32[2]{0}', space=sflag, size = 0x8, scoped, tag = 'scoped memory for tpu_custom_call.1']
    #allocation11 [shape = 'u8[8192]{0}', space=vmem, size = 0x2000, scoped, tag = 'input window, operand 4']
    #allocation12 [shape = 'u8[8192]{0}', space=vmem, size = 0x2000, scoped, tag = 'input window, operand 5']
    #allocation13 [shape = 's32[2]{0}', space=sflag, size = 0x8, scoped, tag = 'scoped memory for tpu_custom_call.1']
    #allocation14 [shape = 'u8[131072]{0}', space=vmem, size = 0x20000, scoped, tag = 'output window, operand 0']
    %15 = vsyncpa [#allocation7], 0
    %s16 = scalar_lea.sflag [#allocation7], 1
    %17 = vsyncpa %s16, 0
    %18 = vsyncpa [#allocation10], 0
    %s19 = scalar_lea.sflag [#allocation10], 1
    %20 = vsyncpa %s19, 0
    %21 = vsyncpa [#allocation13], 0
    %s22 = scalar_lea.sflag [#allocation13], 1
    %23 = vsyncpa %s22, 0
    %24 = vsyncpa [#allocation8], 0
    %s25 = scalar_lea.sflag [#allocation8], 1
    %26 = vsyncpa %s25, 0
    loop: start=0, step=1, limit=14
    $region2: #{tpu_custom_call.1} parent=1 // loop_pre_header
      _
    $region3: #{tpu_custom_call.1} parent=1 // loop_header
      %s28 = sphi 0, %s32
      %p29 = scmp.ge.s32.totalorder %s28, 14
      %s35 = sphi 0, %s54
      %s36 = sphi 0, %s50
      %s37 = sphi 0, %s46
      %s38 = sphi 0, %s35
      %s39 = sphi 0, %s36
      %s40 = sphi 0, %s37
      %s41 = sphi 0, %s38
      %s42 = sphi 0, %s39
      %s43 = sphi 0, %s40
      %s59 = sphi 0, %s61
      %s62 = sphi 0, %s59
      %s63 = sphi 0, %s62
      %s79 = sphi 0, %s63
      %s87 = sphi 0, %s89
      %s90 = sphi 0, %s87
      %s91 = sphi 0, %s90
      %s107 = sphi 0, %s91
      %s113 = sphi 0, %s115
      %s116 = sphi 0, %s113
      %s117 = sphi 0, %s116
      %s133 = sphi 0, %s117
      %s143 = sphi 0, %s145
      %s146 = sphi 0, %s143
      %s147 = sphi 0, %s146
      %s163 = sphi 0, %s147
      %s173 = sphi 0, %s175
      %s176 = sphi 0, %s173
      %s177 = sphi 0, %s176
      %s193 = sphi 0, %s177
      %s201 = sphi 0, %s203
      %s204 = sphi 0, %s201
      %s205 = sphi 0, %s204
      %s221 = sphi 0, %s205
    $region4: #{tpu_custom_call.1} parent=1 // loop_header_branch
      %31 = sbr.rel (%p29) target = $region8
    $region5: #{tpu_custom_call.1} parent=1 // loop_body
      %s33 = ssub.s32 %s28, 1
      %s34 = ssub.s32 %s28, 2
      %s44 = sadd.s32 1, %s37
      %p45 = scmp.ge.s32.totalorder %s44, 2
      %s46 = scalar_select %p45, 0, %s44
      %s47 = sadd.s32 1, %s36
      %s48 = scalar_select %p45, %s47, %s36
      %p49 = scmp.ge.s32.totalorder %s48, 2
      %s50 = scalar_select %p49, 0, %s48
      %s51 = sadd.s32 1, %s35
      %s52 = scalar_select %p49, %s51, %s35
      %p53 = scmp.ge.s32.totalorder %s52, 3
      %s54 = scalar_select %p53, 0, %s52
      %s55 = ssub.s32 %s35, %s54
      %s56 = ssub.s32 %s37, %s46
      %s57 = sor.u32 %s55, %s56
      %p58 = scmp.eq.s32.totalorder %s57, 0
      %s60 = sadd.s32 %s59, 1
      %s61 = scalar_select %p58, %s59, %s60
      %p64 = pneg %p58
      %p65 = scmp.eq.s32.totalorder %s28, 11
      %p66 = por %p64, %p65
      %p67 = scmp.ne.s32.totalorder %s59, %s62
      %p68 = scmp.eq.s32.totalorder %s28, 0
      %p69 = por %p67, %p68
      %p70 = scmp.ne.s32.totalorder %s59, %s62
      %p71 = scmp.eq.s32.totalorder %s33, 11
      %p72 = por %p70, %p71
      %p73 = scmp.ne.s32.totalorder %s62, %s63
      %p74 = scmp.eq.s32.totalorder %s33, 0
      %p75 = por %p73, %p74
      %p76 = scmp.ne.s32.totalorder %s62, %s63
      %p77 = scmp.eq.s32.totalorder %s34, 11
      %p78 = por %p76, %p77
      %p80 = scmp.ne.s32.totalorder %s63, %s79
      %p81 = scmp.eq.s32.totalorder %s34, 0
      %p82 = por %p80, %p81
      %s83 = ssub.s32 %s37, %s46
      %s84 = ssub.s32 %s36, %s50
      %s85 = sor.u32 %s83, %s84
      %p86 = scmp.eq.s32.totalorder %s85, 0
      %s88 = sadd.s32 %s87, 1
      %s89 = scalar_select %p86, %s87, %s88
      %p92 = pneg %p86
      %p93 = scmp.eq.s32.totalorder %s28, 11
      %p94 = por %p92, %p93
      %p95 = scmp.ne.s32.totalorder %s87, %s90
      %p96 = scmp.eq.s32.totalorder %s28, 0
      %p97 = por %p95, %p96
      %p98 = scmp.ne.s32.totalorder %s87, %s90
      %p99 = scmp.eq.s32.totalorder %s33, 11
      %p100 = por %p98, %p99
      %p101 = scmp.ne.s32.totalorder %s90, %s91
      %p102 = scmp.eq.s32.totalorder %s33, 0
      %p103 = por %p101, %p102
      %p104 = scmp.ne.s32.totalorder %s90, %s91
      %p105 = scmp.eq.s32.totalorder %s34, 11
      %p106 = por %p104, %p105
      %p108 = scmp.ne.s32.totalorder %s91, %s107
      %p109 = scmp.eq.s32.totalorder %s34, 0
      %p110 = por %p108, %p109
      %s111 = ssub.s32 %s36, %s50
      %p112 = scmp.eq.s32.totalorder %s111, 0
      %s114 = sadd.s32 %s113, 1
      %s115 = scalar_select %p112, %s113, %s114
      %p118 = pneg %p112
      %p119 = scmp.eq.s32.totalorder %s28, 11
      %p120 = por %p118, %p119
      %p121 = scmp.ne.s32.totalorder %s113, %s116
      %p122 = scmp.eq.s32.totalorder %s28, 0
      %p123 = por %p121, %p122
      %p124 = scmp.ne.s32.totalorder %s113, %s116
      %p125 = scmp.eq.s32.totalorder %s33, 11
      %p126 = por %p124, %p125
      %p127 = scmp.ne.s32.totalorder %s116, %s117
      %p128 = scmp.eq.s32.totalorder %s33, 0
      %p129 = por %p127, %p128
      %p130 = scmp.ne.s32.totalorder %s116, %s117
      %p131 = scmp.eq.s32.totalorder %s34, 11
      %p132 = por %p130, %p131
      %p134 = scmp.ne.s32.totalorder %s117, %s133
      %p135 = scmp.eq.s32.totalorder %s34, 0
      %p136 = por %p134, %p135
      %s137 = sld [smem:[#allocation5 + %s35]]
      %s138 = sld [smem:[#allocation5 + %s54]]
      %s139 = ssub.s32 %s137, %s138
      %s140 = ssub.s32 %s37, %s46
      %s141 = sor.u32 %s139, %s140
      %p142 = scmp.eq.s32.totalorder %s141, 0
      %s144 = sadd.s32 %s143, 1
      %s145 = scalar_select %p142, %s143, %s144
      %p148 = pneg %p142
      %p149 = scmp.eq.s32.totalorder %s28, 11
      %p150 = por %p148, %p149
      %p151 = scmp.ne.s32.totalorder %s143, %s146
      %p152 = scmp.eq.s32.totalorder %s28, 0
      %p153 = por %p151, %p152
      %p154 = scmp.ne.s32.totalorder %s143, %s146
      %p155 = scmp.eq.s32.totalorder %s33, 11
      %p156 = por %p154, %p155
      %p157 = scmp.ne.s32.totalorder %s146, %s147
      %p158 = scmp.eq.s32.totalorder %s33, 0
      %p159 = por %p157, %p158
      %p160 = scmp.ne.s32.totalorder %s146, %s147
      %p161 = scmp.eq.s32.totalorder %s34, 11
      %p162 = por %p160, %p161
      %p164 = scmp.ne.s32.totalorder %s147, %s163
      %p165 = scmp.eq.s32.totalorder %s34, 0
      %p166 = por %p164, %p165
      %s167 = sld [smem:[#allocation5 + %s35]]
      %s168 = sld [smem:[#allocation5 + %s54]]
      %s169 = ssub.s32 %s167, %s168
      %s170 = ssub.s32 %s36, %s50
      %s171 = sor.u32 %s169, %s170
      %p172 = scmp.eq.s32.totalorder %s171, 0
      %s174 = sadd.s32 %s173, 1
      %s175 = scalar_select %p172, %s173, %s174
      %p178 = pneg %p172
      %p179 = scmp.eq.s32.totalorder %s28, 11
      %p180 = por %p178, %p179
      %p181 = scmp.ne.s32.totalorder %s173, %s176
      %p182 = scmp.eq.s32.totalorder %s28, 0
      %p183 = por %p181, %p182
      %p184 = scmp.ne.s32.totalorder %s173, %s176
      %p185 = scmp.eq.s32.totalorder %s33, 11
      %p186 = por %p184, %p185
      %p187 = scmp.ne.s32.totalorder %s176, %s177
      %p188 = scmp.eq.s32.totalorder %s33, 0
      %p189 = por %p187, %p188
      %p190 = scmp.ne.s32.totalorder %s176, %s177
      %p191 = scmp.eq.s32.totalorder %s34, 11
      %p192 = por %p190, %p191
      %p194 = scmp.ne.s32.totalorder %s177, %s193
      %p195 = scmp.eq.s32.totalorder %s34, 0
      %p196 = por %p194, %p195
      %s197 = ssub.s32 %s35, %s54
      %s198 = ssub.s32 %s36, %s50
      %s199 = sor.u32 %s197, %s198
      %p200 = scmp.eq.s32.totalorder %s199, 0
      %s202 = sadd.s32 %s201, 1
      %s203 = scalar_select %p200, %s201, %s202
      %p206 = pneg %p200
      %p207 = scmp.eq.s32.totalorder %s28, 11
      %p208 = por %p206, %p207
      %p209 = scmp.ne.s32.totalorder %s201, %s204
      %p210 = scmp.eq.s32.totalorder %s28, 0
      %p211 = por %p209, %p210
      %p212 = scmp.ne.s32.totalorder %s201, %s204
      %p213 = scmp.eq.s32.totalorder %s33, 11
      %p214 = por %p212, %p213
      %p215 = scmp.ne.s32.totalorder %s204, %s205
      %p216 = scmp.eq.s32.totalorder %s33, 0
      %p217 = por %p215, %p216
      %p218 = scmp.ne.s32.totalorder %s204, %s205
      %p219 = scmp.eq.s32.totalorder %s34, 11
      %p220 = por %p218, %p219
      %p222 = scmp.ne.s32.totalorder %s205, %s221
      %p223 = scmp.eq.s32.totalorder %s34, 0
      %p224 = por %p222, %p223
      %p225 = scmp.le.s32.totalorder 1, %s28
      %p226 = scmp.lt.s32.totalorder %s28, 13
      %p227 = pnand %p225, %p226
      %p228 = pneg %p227
      // Predicated region
      $region9: #{tpu_custom_call.1} parent=5 // pred_check
        _
      $region10: #{tpu_custom_call.1} parent=5 // pred_check_branch
        %230 = sbr.rel (%p227) target = $region12
      $region11: #{tpu_custom_call.1} parent=5 // pred_region
        %s231 = ssub.s32 %s28, 1
      $region12: #{tpu_custom_call.1} parent=5 // pred_fallthru
        _
      %p232 = scmp.lt.s32.totalorder %s28, 12
      // Predicated region
      $region13: #{tpu_custom_call.1} parent=5 // pred_check
        %p233 = pneg %p232
      $region14: #{tpu_custom_call.1} parent=5 // pred_check_branch
        %235 = sbr.rel (%p233) target = $region16
      $region15: #{tpu_custom_call.1} parent=5 // pred_region
        // Predicated region
        $region17: #{tpu_custom_call.1} parent=15 // pred_check
          %p236 = pneg %p69
        $region18: #{tpu_custom_call.1} parent=15 // pred_check_branch
          %238 = sbr.rel (%p236) target = $region20
        $region19: #{tpu_custom_call.1} parent=15 // pred_region
          %s239 = sand.u32 %s59, 1
          %s240 = scalar_lea.sflag [#allocation7], %s239
          %s241 = sand.u32 %s59, 1
          %s242 = smul.addr %s241, 64
          %s243 = scalar_lea.vmem [#allocation6], %s242
          %s244 = smul.u32 8, %s35
          %s245 = smul.u32 2, %s37
          %s247 = ssub.s32 1024, 1024
          %248 = vsyncadd %s240, %s247
          %s249 = smul.addr %s244, 4
          %s250 = sadd.s32 %s245, %s249
          %s251 = smul.addr %s250, 64
          %s252 = scalar_lea.hbm %s1, %s251
          %s253 = sshll.u32 %s243, 4
          %s254 = int_to_ptr.vmem [resolvable:$true] %s253
          %259 = dma.hbm_to_vmem [thread:$0]  %s252, 1024, %s254, %s240, 256, 128, 8
        $region20: #{tpu_custom_call.1} parent=15 // pred_fallthru
          _
        // Predicated region
        $region21: #{tpu_custom_call.1} parent=15 // pred_check
          %p260 = pneg %p97
        $region22: #{tpu_custom_call.1} parent=15 // pred_check_branch
          %262 = sbr.rel (%p260) target = $region24
        $region23: #{tpu_custom_call.1} parent=15 // pred_region
          %s263 = sand.u32 %s28, 1
          %s264 = scalar_lea.sflag [#allocation10], %s263
          %s265 = sand.u32 %s87, 1
          %s266 = smul.addr %s265, 256
          %s267 = scalar_lea.vmem [#allocation9], %s266
          %s268 = smul.u32 32, %s37
          %s269 = smul.u32 2, %s36
          %s271 = ssub.s32 4096, 4096
          %272 = vsyncadd %s264, %s271
          %s273 = smul.addr %s268, 4
          %s274 = sadd.s32 %s269, %s273
          %s275 = smul.addr %s274, 64
          %s276 = scalar_lea.hbm %s2, %s275
          %s277 = sshll.u32 %s267, 4
          %s278 = int_to_ptr.vmem [resolvable:$true] %s277
          %283 = dma.hbm_to_vmem [thread:$0]  %s276, 4096, %s278, %s264, 256, 128, 8
        $region24: #{tpu_custom_call.1} parent=15 // pred_fallthru
          _
        // Predicated region
        $region25: #{tpu_custom_call.1} parent=15 // pred_check
          %p284 = pneg %p123
        $region26: #{tpu_custom_call.1} parent=15 // pred_check_branch
          %286 = sbr.rel (%p284) target = $region28
        $region27: #{tpu_custom_call.1} parent=15 // pred_region
          %s287 = smul.u32 2, %s36
          %p288 = scmp.lt.s32.totalorder %s287, 3
          %s289 = scalar_select %p288, %s287, 3
          %s290 = scalar_lea.vmem %s3, %s289
          %s291 = smul.u32 2, %s36
        $region28: #{tpu_custom_call.1} parent=15 // pred_fallthru
          _
        // Predicated region
        $region29: #{tpu_custom_call.1} parent=15 // pred_check
          %p292 = pneg %p153
        $region30: #{tpu_custom_call.1} parent=15 // pred_check_branch
          %294 = sbr.rel (%p292) target = $region32
        $region31: #{tpu_custom_call.1} parent=15 // pred_region
          %s295 = sand.u32 %s28, 1
          %s296 = scalar_lea.sflag [#allocation10], %s295
          %s297 = sand.u32 %s143, 1
          %s298 = smul.addr %s297, 8
          %s299 = scalar_lea.vmem [#allocation11], %s298
          %s300 = sld [smem:[#allocation5 + %s35]]
          %s301 = smul.u32 2, %s37
          %s303 = ssub.s32 128, 128
          %304 = vsyncadd %s296, %s303
          %s305 = smul.addr %s300, 4
          %s306 = sadd.s32 %s301, %s305
          %s307 = smul.addr %s306, 64
          %s308 = scalar_lea.hbm %s4, %s307
          %s310 = sshll.u32 %s299, 4
          %s311 = int_to_ptr.vmem [resolvable:$true] %s310
          %313 = dma.hbm_to_vmem [thread:$0]  %s308, 128, %s311, %s296
        $region32: #{tpu_custom_call.1} parent=15 // pred_fallthru
          _
        // Predicated region
        $region33: #{tpu_custom_call.1} parent=15 // pred_check
          %p314 = pneg %p183
        $region34: #{tpu_custom_call.1} parent=15 // pred_check_branch
          %316 = sbr.rel (%p314) target = $region36
        $region35: #{tpu_custom_call.1} parent=15 // pred_region
          %s317 = sand.u32 %s173, 1
          %s318 = scalar_lea.sflag [#allocation13], %s317
          %s319 = sand.u32 %s173, 1
          %s320 = smul.addr %s319, 8
          %s321 = scalar_lea.vmem [#allocation12], %s320
          %s322 = sld [smem:[#allocation5 + %s35]]
          %s323 = smul.u32 2, %s36
          %s325 = ssub.s32 128, 128
          %326 = vsyncadd %s318, %s325
          %s327 = smul.addr %s322, 4
          %s328 = sadd.s32 %s323, %s327
          %s329 = smul.addr %s328, 64
          %s330 = scalar_lea.hbm %s5, %s329
          %s332 = sshll.u32 %s321, 4
          %s333 = int_to_ptr.vmem [resolvable:$true] %s332
          %335 = dma.hbm_to_vmem [thread:$0]  %s330, 128, %s333, %s318
        $region36: #{tpu_custom_call.1} parent=15 // pred_fallthru
          _
      $region16: #{tpu_custom_call.1} parent=5 // pred_fallthru
        _
      %p336 = scmp.le.s32.totalorder 1, %s28
      %p337 = scmp.lt.s32.totalorder %s28, 13
      %p338 = pnand %p336, %p337
      %p339 = pneg %p338
      // Predicated region
      $region37: #{tpu_custom_call.1} parent=5 // pred_check
        _
      $region38: #{tpu_custom_call.1} parent=5 // pred_check_branch
        %341 = sbr.rel (%p338) target = $region40
      $region39: #{tpu_custom_call.1} parent=5 // pred_region
        %s342 = ssub.s32 %s28, 1
        %s343 = sand.u32 %s62, 1
        %s344 = scalar_lea.sflag [#allocation7], %s343
        %s345 = sand.u32 %s62, 1
        %s346 = smul.addr %s345, 64
        %s347 = scalar_lea.vmem [#allocation6], %s346
        // Predicated region
        $region41: #{tpu_custom_call.1} parent=39 // pred_check
          %p348 = pneg %p75
        $region42: #{tpu_custom_call.1} parent=39 // pred_check_branch
          %350 = sbr.rel (%p348) target = $region44
        $region43: #{tpu_custom_call.1} parent=39 // pred_region
          %351 = dma.done %s344, 1024
        $region44: #{tpu_custom_call.1} parent=39 // pred_fallthru
          _
        %s352 = sand.u32 %s33, 1
        %s353 = scalar_lea.sflag [#allocation10], %s352
        %s354 = sand.u32 %s90, 1
        %s355 = smul.addr %s354, 256
        %s356 = scalar_lea.vmem [#allocation9], %s355
        // Predicated region
        $region45: #{tpu_custom_call.1} parent=39 // pred_check
          %p357 = pneg %p103
        $region46: #{tpu_custom_call.1} parent=39 // pred_check_branch
          %359 = sbr.rel (%p357) target = $region48
        $region47: #{tpu_custom_call.1} parent=39 // pred_region
          %360 = dma.done %s353, 4096
        $region48: #{tpu_custom_call.1} parent=39 // pred_fallthru
          _
        %s361 = sand.u32 %s33, 1
        %s362 = scalar_lea.sflag [#allocation10], %s361
        %s363 = sand.u32 %s146, 1
        %s364 = smul.addr %s363, 8
        %s365 = scalar_lea.vmem [#allocation11], %s364
        // Predicated region
        $region49: #{tpu_custom_call.1} parent=39 // pred_check
          %p366 = pneg %p159
        $region50: #{tpu_custom_call.1} parent=39 // pred_check_branch
          %368 = sbr.rel (%p366) target = $region52
        $region51: #{tpu_custom_call.1} parent=39 // pred_region
          %369 = dma.done %s362, 128
        $region52: #{tpu_custom_call.1} parent=39 // pred_fallthru
          _
        %s370 = sand.u32 %s176, 1
        %s371 = scalar_lea.sflag [#allocation13], %s370
        %s372 = sand.u32 %s176, 1
        %s373 = smul.addr %s372, 8
        %s374 = scalar_lea.vmem [#allocation12], %s373
        // Predicated region
        $region53: #{tpu_custom_call.1} parent=39 // pred_check
          %p375 = pneg %p189
        $region54: #{tpu_custom_call.1} parent=39 // pred_check_branch
          %377 = sbr.rel (%p375) target = $region56
        $region55: #{tpu_custom_call.1} parent=39 // pred_region
          %378 = dma.done %s371, 128
        $region56: #{tpu_custom_call.1} parent=39 // pred_fallthru
          _
        %s379 = sand.u32 %s62, 1
        %s380 = scalar_lea.sflag [#allocation7], %s379
        %s381 = sand.u32 %s62, 1
        %s382 = smul.addr %s381, 64
        %s383 = scalar_lea.vmem [#allocation6], %s382
        %p384 = pneg %p75
        %p385 = pneg %p72
        %s386 = sand.u32 %s33, 1
        %s387 = scalar_lea.sflag [#allocation10], %s386
        %s388 = sand.u32 %s90, 1
        %s389 = smul.addr %s388, 256
        %s390 = scalar_lea.vmem [#allocation9], %s389
        %p391 = pneg %p103
        %p392 = pneg %p100
        %s393 = smul.u32 2, %s39
        %p394 = scmp.lt.s32.totalorder %s393, 3
        %s395 = scalar_select %p394, %s393, 3
        %s396 = scalar_lea.vmem %s3, %s395
        %p397 = pneg %p129
        %p398 = pneg %p126
        %s399 = sand.u32 %s33, 1
        %s400 = scalar_lea.sflag [#allocation10], %s399
        %s401 = sand.u32 %s146, 1
        %s402 = smul.addr %s401, 8
        %s403 = scalar_lea.vmem [#allocation11], %s402
        %p404 = pneg %p159
        %p405 = pneg %p156
        %s406 = sand.u32 %s176, 1
        %s407 = scalar_lea.sflag [#allocation13], %s406
        %s408 = sand.u32 %s176, 1
        %s409 = smul.addr %s408, 8
        %s410 = scalar_lea.vmem [#allocation12], %s409
        %p411 = pneg %p189
        %p412 = pneg %p186
        %p413 = pneg %p217
        %p414 = pneg %p214
        %s415 = sand.u32 %s204, 1
        %s416 = scalar_lea.sflag [#allocation8], %s415
        %s417 = sand.u32 %s204, 1
        %s418 = smul.addr %s417, 128
        %s419 = scalar_lea.vmem [#allocation14], %s418
        %s420 = smul.u32 8, %s38
        %s421 = smul.u32 2, %s40
        %s422 = smul.u32 32, %s40
        %s423 = smul.u32 2, %s39
        %s424 = smul.u32 2, %s39
        %p425 = scmp.lt.s32.totalorder %s424, 3
        %s426 = scalar_select %p425, %s424, 3
        %s427 = scalar_lea.vmem %s3, %s426
        %s428 = smul.u32 2, %s39
        %s429 = sld [smem:[#allocation5 + %s38]]
        %s430 = smul.u32 2, %s40
        %s431 = sld [smem:[#allocation5 + %s38]]
        %s432 = smul.u32 2, %s39
        %s433 = smul.u32 8, %s38
        %s434 = smul.u32 2, %s39
        %p436 = scmp.eq.s32.totalorder %s40, 0
        // Predicated region
        $region57: #{tpu_custom_call.1} parent=39 // pred_check
          %p437 = pneg %p436
        $region58: #{tpu_custom_call.1} parent=39 // pred_check_branch
          %439 = sbr.rel (%p437) target = $region60
        $region59: #{tpu_custom_call.1} parent=39 // pred_region
          %v440 = vld [vmem:[%s427] sm:$0x3]
          %v442 = vlaneseq
          %v443 = vshrl.u32 %v442, 7
          %v444 = vsub.s32 0, %v443
          %v445 = vrot.slane %v440, %v444
          %v446 = vlaneseq
          %v447 = vshrl.u32 %v446, 7
          %v448 = vsub.s32 1, %v447
          %v449 = vrot.slane %v440, %v448
          %452 = vst [vmem:[#allocation2] sm:$0xff] %v445
          %453 = vst [vmem:[#allocation2 + $0x8] sm:$0xff] %v449
          %454 = vst [vmem:[#allocation2 + $0x10] sm:$0xff] %v445
          %455 = vst [vmem:[#allocation2 + $0x18] sm:$0xff] %v449
          %456 = vst [vmem:[#allocation2 + $0x20] sm:$0xff] %v445
          %457 = vst [vmem:[#allocation2 + $0x28] sm:$0xff] %v449
          %458 = vst [vmem:[#allocation2 + $0x30] sm:$0xff] %v445
          %459 = vst [vmem:[#allocation2 + $0x38] sm:$0xff] %v449
          %460 = vst [vmem:[#allocation2 + $0x40] sm:$0xff] %v445
          %461 = vst [vmem:[#allocation2 + $0x48] sm:$0xff] %v449
          %462 = vst [vmem:[#allocation2 + $0x50] sm:$0xff] %v445
          %463 = vst [vmem:[#allocation2 + $0x58] sm:$0xff] %v449
          %464 = vst [vmem:[#allocation2 + $0x60] sm:$0xff] %v445
          %465 = vst [vmem:[#allocation2 + $0x68] sm:$0xff] %v449
          %466 = vst [vmem:[#allocation2 + $0x70] sm:$0xff] %v445
          %467 = vst [vmem:[#allocation2 + $0x78] sm:$0xff] %v449
        $region60: #{tpu_custom_call.1} parent=39 // pred_fallthru
          _
        %v468 = vld [vmem:[%s347] sm:$0xff]
        %v469 = vld [vmem:[%s347 + $0x8] sm:$0xff]
        %v470 = vld [vmem:[%s347 + $0x10] sm:$0xff]
        %v471 = vld [vmem:[%s347 + $0x18] sm:$0xff]
        %v472 = vld [vmem:[%s347 + $0x20] sm:$0xff]
        %v473 = vld [vmem:[%s347 + $0x28] sm:$0xff]
        %v474 = vld [vmem:[%s347 + $0x30] sm:$0xff]
        %v475 = vld [vmem:[%s347 + $0x38] sm:$0xff]
        %v476 = vld [vmem:[#allocation2] sm:$0xff]
        %v477 = vld [vmem:[#allocation2 + $0x8] sm:$0xff]
        %v478 = vld [vmem:[#allocation2 + $0x10] sm:$0xff]
        %v479 = vld [vmem:[#allocation2 + $0x18] sm:$0xff]
        %v480 = vld [vmem:[#allocation2 + $0x20] sm:$0xff]
        %v481 = vld [vmem:[#allocation2 + $0x28] sm:$0xff]
        %v482 = vld [vmem:[#allocation2 + $0x30] sm:$0xff]
        %v483 = vld [vmem:[#allocation2 + $0x38] sm:$0xff]
        %v484 = vld [vmem:[#allocation2 + $0x40] sm:$0xff]
        %v485 = vld [vmem:[#allocation2 + $0x48] sm:$0xff]
        %v486 = vld [vmem:[#allocation2 + $0x50] sm:$0xff]
        %v487 = vld [vmem:[#allocation2 + $0x58] sm:$0xff]
        %v488 = vld [vmem:[#allocation2 + $0x60] sm:$0xff]
        %v489 = vld [vmem:[#allocation2 + $0x68] sm:$0xff]
        %v490 = vld [vmem:[#allocation2 + $0x70] sm:$0xff]
        %v491 = vld [vmem:[#allocation2 + $0x78] sm:$0xff]
        %v492 = vld [vmem:[%s356] sm:$0xff]
        %v493 = vld [vmem:[%s356 + $0x8] sm:$0xff]
        %v494 = vld [vmem:[%s356 + $0x10] sm:$0xff]
        %v495 = vld [vmem:[%s356 + $0x18] sm:$0xff]
        %v496 = vld [vmem:[%s356 + $0x20] sm:$0xff]
        %v497 = vld [vmem:[%s356 + $0x28] sm:$0xff]
        %v498 = vld [vmem:[%s356 + $0x30] sm:$0xff]
        %v499 = vld [vmem:[%s356 + $0x38] sm:$0xff]
        %v500 = vld [vmem:[%s356 + $0x40] sm:$0xff]
        %v501 = vld [vmem:[%s356 + $0x48] sm:$0xff]
        %v502 = vld [vmem:[%s356 + $0x50] sm:$0xff]
        %v503 = vld [vmem:[%s356 + $0x58] sm:$0xff]
        %v504 = vld [vmem:[%s356 + $0x60] sm:$0xff]
        %v505 = vld [vmem:[%s356 + $0x68] sm:$0xff]
        %v506 = vld [vmem:[%s356 + $0x70] sm:$0xff]
        %v507 = vld [vmem:[%s356 + $0x78] sm:$0xff]
        %v508 = vld [vmem:[%s356 + $0x80] sm:$0xff]
        %v509 = vld [vmem:[%s356 + $0x88] sm:$0xff]
        %v510 = vld [vmem:[%s356 + $0x90] sm:$0xff]
        %v511 = vld [vmem:[%s356 + $0x98] sm:$0xff]
        %v512 = vld [vmem:[%s356 + $0xa0] sm:$0xff]
        %v513 = vld [vmem:[%s356 + $0xa8] sm:$0xff]
        %v514 = vld [vmem:[%s356 + $0xb0] sm:$0xff]
        %v515 = vld [vmem:[%s356 + $0xb8] sm:$0xff]
        %v516 = vld [vmem:[%s356 + $0xc0] sm:$0xff]
        %v517 = vld [vmem:[%s356 + $0xc8] sm:$0xff]
        %v518 = vld [vmem:[%s356 + $0xd0] sm:$0xff]
        %v519 = vld [vmem:[%s356 + $0xd8] sm:$0xff]
        %v520 = vld [vmem:[%s356 + $0xe0] sm:$0xff]
        %v521 = vld [vmem:[%s356 + $0xe8] sm:$0xff]
        %v522 = vld [vmem:[%s356 + $0xf0] sm:$0xff]
        %v523 = vld [vmem:[%s356 + $0xf8] sm:$0xff]
        %v532 = vunpack.c.l.b16 %v468
        %v533 = vunpack.c.h.b16 %v468
        %v534 = vunpack.c.l.b16 %v469
        %v535 = vunpack.c.h.b16 %v469
        %v536 = vunpack.c.l.b16 %v470
        %v537 = vunpack.c.h.b16 %v470
        %v538 = vunpack.c.l.b16 %v471
        %v539 = vunpack.c.h.b16 %v471
        %v540 = vunpack.c.l.b16 %v472
        %v541 = vunpack.c.h.b16 %v472
        %v542 = vunpack.c.l.b16 %v473
        %v543 = vunpack.c.h.b16 %v473
        %v544 = vunpack.c.l.b16 %v474
        %v545 = vunpack.c.h.b16 %v474
        %v546 = vunpack.c.l.b16 %v475
        %v547 = vunpack.c.h.b16 %v475
        %v548 = vpack.c.b16 %v534, %v532
        %v549 = vpack.c.b16 %v535, %v533
        %v550 = vpack.c.b16 %v538, %v536
        %v551 = vpack.c.b16 %v539, %v537
        %v552 = vpack.c.b16 %v542, %v540
        %v553 = vpack.c.b16 %v543, %v541
        %v554 = vpack.c.b16 %v546, %v544
        %v555 = vpack.c.b16 %v547, %v545
        %v596 = vunpack.c.l.b16 %v492
        %v597 = vunpack.c.h.b16 %v492
        %v598 = vunpack.c.l.b16 %v493
        %v599 = vunpack.c.h.b16 %v493
        %v600 = vunpack.c.l.b16 %v494
        %v601 = vunpack.c.h.b16 %v494
        %v602 = vunpack.c.l.b16 %v495
        %v603 = vunpack.c.h.b16 %v495
        %v604 = vunpack.c.l.b16 %v496
        %v605 = vunpack.c.h.b16 %v496
        %v606 = vunpack.c.l.b16 %v497
        %v607 = vunpack.c.h.b16 %v497
        %v608 = vunpack.c.l.b16 %v498
        %v609 = vunpack.c.h.b16 %v498
        %v610 = vunpack.c.l.b16 %v499
        %v611 = vunpack.c.h.b16 %v499
        %v612 = vunpack.c.l.b16 %v500
        %v613 = vunpack.c.h.b16 %v500
        %v614 = vunpack.c.l.b16 %v501
        %v615 = vunpack.c.h.b16 %v501
        %v616 = vunpack.c.l.b16 %v502
        %v617 = vunpack.c.h.b16 %v502
        %v618 = vunpack.c.l.b16 %v503
        %v619 = vunpack.c.h.b16 %v503
        %v620 = vunpack.c.l.b16 %v504
        %v621 = vunpack.c.h.b16 %v504
        %v622 = vunpack.c.l.b16 %v505
        %v623 = vunpack.c.h.b16 %v505
        %v624 = vunpack.c.l.b16 %v506
        %v625 = vunpack.c.h.b16 %v506
        %v626 = vunpack.c.l.b16 %v507
        %v627 = vunpack.c.h.b16 %v507
        %v628 = vunpack.c.l.b16 %v508
        %v629 = vunpack.c.h.b16 %v508
        %v630 = vunpack.c.l.b16 %v509
        %v631 = vunpack.c.h.b16 %v509
        %v632 = vunpack.c.l.b16 %v510
        %v633 = vunpack.c.h.b16 %v510
        %v634 = vunpack.c.l.b16 %v511
        %v635 = vunpack.c.h.b16 %v511
        %v636 = vunpack.c.l.b16 %v512
        %v637 = vunpack.c.h.b16 %v512
        %v638 = vunpack.c.l.b16 %v513
        %v639 = vunpack.c.h.b16 %v513
        %v640 = vunpack.c.l.b16 %v514
        %v641 = vunpack.c.h.b16 %v514
        %v642 = vunpack.c.l.b16 %v515
        %v643 = vunpack.c.h.b16 %v515
        %v644 = vunpack.c.l.b16 %v516
        %v645 = vunpack.c.h.b16 %v516
        %v646 = vunpack.c.l.b16 %v517
        %v647 = vunpack.c.h.b16 %v517
        %v648 = vunpack.c.l.b16 %v518
        %v649 = vunpack.c.h.b16 %v518
        %v650 = vunpack.c.l.b16 %v519
        %v651 = vunpack.c.h.b16 %v519
        %v652 = vunpack.c.l.b16 %v520
        %v653 = vunpack.c.h.b16 %v520
        %v654 = vunpack.c.l.b16 %v521
        %v655 = vunpack.c.h.b16 %v521
        %v656 = vunpack.c.l.b16 %v522
        %v657 = vunpack.c.h.b16 %v522
        %v658 = vunpack.c.l.b16 %v523
        %v659 = vunpack.c.h.b16 %v523
        %v660 = vpack.c.b16 %v598, %v596
        %v661 = vpack.c.b16 %v599, %v597
        %v662 = vpack.c.b16 %v602, %v600
        %v663 = vpack.c.b16 %v603, %v601
        %v664 = vpack.c.b16 %v606, %v604
        %v665 = vpack.c.b16 %v607, %v605
        %v666 = vpack.c.b16 %v610, %v608
        %v667 = vpack.c.b16 %v611, %v609
        %v668 = vpack.c.b16 %v614, %v612
        %v669 = vpack.c.b16 %v615, %v613
        %v670 = vpack.c.b16 %v618, %v616
        %v671 = vpack.c.b16 %v619, %v617
        %v672 = vpack.c.b16 %v622, %v620
        %v673 = vpack.c.b16 %v623, %v621
        %v674 = vpack.c.b16 %v626, %v624
        %v675 = vpack.c.b16 %v627, %v625
        %v676 = vpack.c.b16 %v630, %v628
        %v677 = vpack.c.b16 %v631, %v629
        %v678 = vpack.c.b16 %v634, %v632
        %v679 = vpack.c.b16 %v635, %v633
        %v680 = vpack.c.b16 %v638, %v636
        %v681 = vpack.c.b16 %v639, %v637
        %v682 = vpack.c.b16 %v642, %v640
        %v683 = vpack.c.b16 %v643, %v641
        %v684 = vpack.c.b16 %v646, %v644
        %v685 = vpack.c.b16 %v647, %v645
        %v686 = vpack.c.b16 %v650, %v648
        %v687 = vpack.c.b16 %v651, %v649
        %v688 = vpack.c.b16 %v654, %v652
        %v689 = vpack.c.b16 %v655, %v653
        %v690 = vpack.c.b16 %v658, %v656
        %v691 = vpack.c.b16 %v659, %v657
        %724 = vmatprep.subr.bf16.mxu0 %v661
        %725 = vmatpush1.bf16.msra.mxu0 %v660
        %726 = vmatprep.subr.bf16.mxu0 %v663
        %727 = vmatpush1.bf16.msra.mxu0 %v662
        %728 = vmatprep.subr.bf16.mxu0 %v665
        %729 = vmatpush1.bf16.msra.mxu0 %v664
        %730 = vmatprep.subr.bf16.mxu0 %v667
        %731 = vmatpush1.bf16.msra.mxu0 %v666
        %732 = vmatprep.subr.bf16.mxu0 %v669
        %733 = vmatpush1.bf16.msra.mxu0 %v668
        %734 = vmatprep.subr.bf16.mxu0 %v671
        %735 = vmatpush1.bf16.msra.mxu0 %v670
        %736 = vmatprep.subr.bf16.mxu0 %v673
        %737 = vmatpush1.bf16.msra.mxu0 %v672
        %738 = vmatprep.subr.bf16.mxu0 %v675
        %739 = vmatpush1.bf16.msra.mxu0 %v674
        %740 = vmatprep.subr.bf16.mxu0 %v677
        %741 = vmatpush1.bf16.msra.mxu0 %v676
        %742 = vmatprep.subr.bf16.mxu0 %v679
        %743 = vmatpush1.bf16.msra.mxu0 %v678
        %744 = vmatprep.subr.bf16.mxu0 %v681
        %745 = vmatpush1.bf16.msra.mxu0 %v680
        %746 = vmatprep.subr.bf16.mxu0 %v683
        %747 = vmatpush1.bf16.msra.mxu0 %v682
        %748 = vmatprep.subr.bf16.mxu0 %v685
        %749 = vmatpush1.bf16.msra.mxu0 %v684
        %750 = vmatprep.subr.bf16.mxu0 %v687
        %751 = vmatpush1.bf16.msra.mxu0 %v686
        %752 = vmatprep.subr.bf16.mxu0 %v689
        %753 = vmatpush1.bf16.msra.mxu0 %v688
        %754 = vmatprep.subr.bf16.mxu0 %v691
        %755 = vmatpush1.bf16.msra.mxu0 %v690
        %756 = vmatprep.mubr.bf16.mxu0 %v549
        %757 = vmatmul.mubr.bf16.gmra.mrb[0].mxu0 %v548
        %v758 = vpop.f32.mrb[0].mxu0
        %v759 = vadd.f32 0.0, %v758
        %v760 = vpop.f32.mrb[0].mxu0
        %v761 = vadd.f32 0.0, %v760
        %v762 = vpop.f32.mrb[0].mxu0
        %v763 = vadd.f32 0.0, %v762
        %v764 = vpop.f32.mrb[0].mxu0
        %v765 = vadd.f32 0.0, %v764
        %766 = vmatprep.mubr.bf16.mxu0 %v551
        %767 = vmatmul.mubr.bf16.gmra.mrb[0].mxu0 %v550
        %v768 = vpop.f32.mrb[0].mxu0
        %v769 = vadd.f32 0.0, %v768
        %v770 = vpop.f32.mrb[0].mxu0
        %v771 = vadd.f32 0.0, %v770
        %v772 = vpop.f32.mrb[0].mxu0
        %v773 = vadd.f32 0.0, %v772
        %v774 = vpop.f32.mrb[0].mxu0
        %v775 = vadd.f32 0.0, %v774
        %776 = vmatprep.mubr.bf16.mxu0 %v553
        %777 = vmatmul.mubr.bf16.gmra.mrb[0].mxu0 %v552
        %v778 = vpop.f32.mrb[0].mxu0
        %v779 = vadd.f32 0.0, %v778
        %v780 = vpop.f32.mrb[0].mxu0
        %v781 = vadd.f32 0.0, %v780
        %v782 = vpop.f32.mrb[0].mxu0
        %v783 = vadd.f32 0.0, %v782
        %v784 = vpop.f32.mrb[0].mxu0
        %v785 = vadd.f32 0.0, %v784
        %786 = vmatprep.mubr.bf16.mxu0 %v555
        %787 = vmatmul.mubr.bf16.gmra.mrb[0].mxu0 %v554
        %v788 = vpop.f32.mrb[0].mxu0
        %v789 = vadd.f32 0.0, %v788
        %v790 = vpop.f32.mrb[0].mxu0
        %v791 = vadd.f32 0.0, %v790
        %v792 = vpop.f32.mrb[0].mxu0
        %v793 = vadd.f32 0.0, %v792
        %v794 = vpop.f32.mrb[0].mxu0
        %v795 = vadd.f32 0.0, %v794
        %796 = vdwg.mxu0
        %v797 = vadd.f32 %v476, %v759
        %v798 = vadd.f32 %v477, %v761
        %v799 = vadd.f32 %v478, %v763
        %v800 = vadd.f32 %v479, %v765
        %v801 = vadd.f32 %v480, %v769
        %v802 = vadd.f32 %v481, %v771
        %v803 = vadd.f32 %v482, %v773
        %v804 = vadd.f32 %v483, %v775
        %v805 = vadd.f32 %v484, %v779
        %v806 = vadd.f32 %v485, %v781
        %v807 = vadd.f32 %v486, %v783
        %v808 = vadd.f32 %v487, %v785
        %v809 = vadd.f32 %v488, %v789
        %v810 = vadd.f32 %v489, %v791
        %v811 = vadd.f32 %v490, %v793
        %v812 = vadd.f32 %v491, %v795
        %813 = vst [vmem:[#allocation2] sm:$0xff] %v797
        %814 = vst [vmem:[#allocation2 + $0x8] sm:$0xff] %v798
        %815 = vst [vmem:[#allocation2 + $0x10] sm:$0xff] %v799
        %816 = vst [vmem:[#allocation2 + $0x18] sm:$0xff] %v800
        %817 = vst [vmem:[#allocation2 + $0x20] sm:$0xff] %v801
        %818 = vst [vmem:[#allocation2 + $0x28] sm:$0xff] %v802
        %819 = vst [vmem:[#allocation2 + $0x30] sm:$0xff] %v803
        %820 = vst [vmem:[#allocation2 + $0x38] sm:$0xff] %v804
        %821 = vst [vmem:[#allocation2 + $0x40] sm:$0xff] %v805
        %822 = vst [vmem:[#allocation2 + $0x48] sm:$0xff] %v806
        %823 = vst [vmem:[#allocation2 + $0x50] sm:$0xff] %v807
        %824 = vst [vmem:[#allocation2 + $0x58] sm:$0xff] %v808
        %825 = vst [vmem:[#allocation2 + $0x60] sm:$0xff] %v809
        %826 = vst [vmem:[#allocation2 + $0x68] sm:$0xff] %v810
        %827 = vst [vmem:[#allocation2 + $0x70] sm:$0xff] %v811
        %828 = vst [vmem:[#allocation2 + $0x78] sm:$0xff] %v812
        %p829 = scmp.eq.s32.totalorder %s39, 0
        // Predicated region
        $region61: #{tpu_custom_call.1} parent=39 // pred_check
          %p830 = pneg %p829
        $region62: #{tpu_custom_call.1} parent=39 // pred_check_branch
          %832 = sbr.rel (%p830) target = $region64
        $region63: #{tpu_custom_call.1} parent=39 // pred_region
          // Predicated region
          $region65: #{tpu_custom_call.1} parent=63 // pred_check
            %p833 = pneg %p436
          $region66: #{tpu_custom_call.1} parent=63 // pred_check_branch
            %835 = sbr.rel (%p833) target = $region68
          $region67: #{tpu_custom_call.1} parent=63 // pred_region
            %vm836 = vcmask 64512
            %837 = vst.msk [vmem:[#allocation3] sm:$0xff] %vm836, 0.0
            %838 = vst.msk [vmem:[#allocation3 + $0x8] sm:$0xff] %vm836, 0.0
            %839 = vst.msk [vmem:[#allocation3 + $0x10] sm:$0xff] %vm836, 0.0
            %840 = vst.msk [vmem:[#allocation3 + $0x18] sm:$0xff] %vm836, 0.0
            %841 = vst.msk [vmem:[#allocation3 + $0x20] sm:$0xff] %vm836, 0.0
            %842 = vst.msk [vmem:[#allocation3 + $0x28] sm:$0xff] %vm836, 0.0
            %843 = vst.msk [vmem:[#allocation3 + $0x30] sm:$0xff] %vm836, 0.0
            %844 = vst.msk [vmem:[#allocation3 + $0x38] sm:$0xff] %vm836, 0.0
          $region68: #{tpu_custom_call.1} parent=63 // pred_fallthru
            _
          %v845 = vld [vmem:[#allocation3] sm:$0xff]
          %v846 = vld [vmem:[#allocation3 + $0x8] sm:$0xff]
          %v847 = vld [vmem:[#allocation3 + $0x10] sm:$0xff]
          %v848 = vld [vmem:[#allocation3 + $0x18] sm:$0xff]
          %v849 = vld [vmem:[#allocation3 + $0x20] sm:$0xff]
          %v850 = vld [vmem:[#allocation3 + $0x28] sm:$0xff]
          %v851 = vld [vmem:[#allocation3 + $0x30] sm:$0xff]
          %v852 = vld [vmem:[#allocation3 + $0x38] sm:$0xff]
          %v853 = vld [vmem:[%s365] sm:$0xff]
          %v855 = vunpack.c.l.b16 %v853
          %v856 = vunpack.c.h.b16 %v853
          %v857 = vpack.c.b16 %v855, %v855
          %v858 = vpack.c.b16 %v856, %v856
          %861 = vmatprep.subr.bf16.mxu0 %v858
          %862 = vmatpush1.bf16.xpose.msra.mxu0 %v857
          %863 = vmatprep.subr.bf16.mxu0 0
          %864 = vmatpush1.bf16.xpose.msra.mxu0 0
          %865 = vmatprep.subr.bf16.mxu0 0
          %866 = vmatpush1.bf16.xpose.msra.mxu0 0
          %867 = vmatprep.subr.bf16.mxu0 0
          %868 = vmatpush1.bf16.xpose.msra.mxu0 0
          %869 = vmatprep.subr.bf16.mxu0 0
          %870 = vmatpush1.bf16.xpose.msra.mxu0 0
          %871 = vmatprep.subr.bf16.mxu0 0
          %872 = vmatpush1.bf16.xpose.msra.mxu0 0
          %873 = vmatprep.subr.bf16.mxu0 0
          %874 = vmatpush1.bf16.xpose.msra.mxu0 0
          %875 = vmatprep.subr.bf16.mxu0 0
          %876 = vmatpush1.bf16.xpose.msra.mxu0 0
          %877 = vmatprep.subr.bf16.mxu0 0
          %878 = vmatpush1.bf16.xpose.msra.mxu0 0
          %879 = vmatprep.subr.bf16.mxu0 0
          %880 = vmatpush1.bf16.xpose.msra.mxu0 0
          %881 = vmatprep.subr.bf16.mxu0 0
          %882 = vmatpush1.bf16.xpose.msra.mxu0 0
          %883 = vmatprep.subr.bf16.mxu0 0
          %884 = vmatpush1.bf16.xpose.msra.mxu0 0
          %885 = vmatprep.subr.bf16.mxu0 0
          %886 = vmatpush1.bf16.xpose.msra.mxu0 0
          %887 = vmatprep.subr.bf16.mxu0 0
          %888 = vmatpush1.bf16.xpose.msra.mxu0 0
          %889 = vmatprep.subr.bf16.mxu0 0
          %890 = vmatpush1.bf16.xpose.msra.mxu0 0
          %891 = vmatprep.subr.bf16.mxu0 0
          %892 = vmatpush1.bf16.xpose.msra.mxu0 0
          %893 = vmatprep.mubr.bf16.mxu0 %v549
          %894 = vmatmul.mubr.bf16.gmra.mrb[0].mxu0 %v548
          %v895 = vpop.f32.mrb[0].mxu0
          %v896 = vadd.f32 0.0, %v895
          %v897 = vpop.f32.mrb[0].mxu0
          %v898 = vpop.f32.mrb[0].mxu0
          %v899 = vadd.f32 0.0, %v898
          %v900 = vpop.f32.mrb[0].mxu0
          %901 = vmatprep.mubr.bf16.mxu0 %v551
          %902 = vmatmul.mubr.bf16.gmra.mrb[0].mxu0 %v550
          %v903 = vpop.f32.mrb[0].mxu0
          %v904 = vadd.f32 0.0, %v903
          %v905 = vpop.f32.mrb[0].mxu0
          %v906 = vpop.f32.mrb[0].mxu0
          %v907 = vadd.f32 0.0, %v906
          %v908 = vpop.f32.mrb[0].mxu0
          %909 = vmatprep.mubr.bf16.mxu0 %v553
          %910 = vmatmul.mubr.bf16.gmra.mrb[0].mxu0 %v552
          %v911 = vpop.f32.mrb[0].mxu0
          %v912 = vadd.f32 0.0, %v911
          %v913 = vpop.f32.mrb[0].mxu0
          %v914 = vpop.f32.mrb[0].mxu0
          %v915 = vadd.f32 0.0, %v914
          %v916 = vpop.f32.mrb[0].mxu0
          %917 = vmatprep.mubr.bf16.mxu0 %v555
          %918 = vmatmul.mubr.bf16.gmra.mrb[0].mxu0 %v554
          %v919 = vpop.f32.mrb[0].mxu0
          %v920 = vadd.f32 0.0, %v919
          %v921 = vpop.f32.mrb[0].mxu0
          %v922 = vpop.f32.mrb[0].mxu0
          %v923 = vadd.f32 0.0, %v922
          %v924 = vpop.f32.mrb[0].mxu0
          %925 = vdwg.mxu0
          %v926 = vadd.f32 %v845, %v896
          %v927 = vadd.f32 %v846, %v899
          %v928 = vadd.f32 %v847, %v904
          %v929 = vadd.f32 %v848, %v907
          %v930 = vadd.f32 %v849, %v912
          %v931 = vadd.f32 %v850, %v915
          %v932 = vadd.f32 %v851, %v920
          %v933 = vadd.f32 %v852, %v923
          %vm934 = vcmask 64512
          %935 = vst.msk [vmem:[#allocation3] sm:$0xff] %vm934, %v926
          %936 = vst.msk [vmem:[#allocation3 + $0x8] sm:$0xff] %vm934, %v927
          %937 = vst.msk [vmem:[#allocation3 + $0x10] sm:$0xff] %vm934, %v928
          %938 = vst.msk [vmem:[#allocation3 + $0x18] sm:$0xff] %vm934, %v929
          %939 = vst.msk [vmem:[#allocation3 + $0x20] sm:$0xff] %vm934, %v930
          %940 = vst.msk [vmem:[#allocation3 + $0x28] sm:$0xff] %vm934, %v931
          %941 = vst.msk [vmem:[#allocation3 + $0x30] sm:$0xff] %vm934, %v932
          %942 = vst.msk [vmem:[#allocation3 + $0x38] sm:$0xff] %vm934, %v933
        $region64: #{tpu_custom_call.1} parent=39 // pred_fallthru
          _
        %p943 = scmp.eq.s32.totalorder %s40, 1
        // Predicated region
        $region69: #{tpu_custom_call.1} parent=39 // pred_check
          %p944 = pneg %p943
        $region70: #{tpu_custom_call.1} parent=39 // pred_check_branch
          %946 = sbr.rel (%p944) target = $region72
        $region71: #{tpu_custom_call.1} parent=39 // pred_region
          %v947 = vld [vmem:[#allocation3] sm:$0xff]
          %v948 = vld [vmem:[#allocation3 + $0x8] sm:$0xff]
          %v949 = vld [vmem:[#allocation3 + $0x10] sm:$0xff]
          %v950 = vld [vmem:[#allocation3 + $0x18] sm:$0xff]
          %v951 = vld [vmem:[#allocation3 + $0x20] sm:$0xff]
          %v952 = vld [vmem:[#allocation3 + $0x28] sm:$0xff]
          %v953 = vld [vmem:[#allocation3 + $0x30] sm:$0xff]
          %v954 = vld [vmem:[#allocation3 + $0x38] sm:$0xff]
          %v955 = vpack.c.bf16 %v948, %v947
          %v956 = vpack.c.bf16 %v950, %v949
          %v957 = vpack.c.bf16 %v952, %v951
          %v958 = vpack.c.bf16 %v954, %v953
          %v959 = vld [vmem:[%s374] sm:$0xff]
          %v961 = vunpack.c.l.b16 %v959
          %v962 = vunpack.c.h.b16 %v959
          %v963 = vpack.c.b16 %v961, %v961
          %v964 = vpack.c.b16 %v962, %v962
          %vm965 = vcmask 64512
          %v967 = vsel %vm965, %v955, 0
          %v970 = vsel %vm965, %v956, 0
          %v973 = vsel %vm965, %v957, 0
          %v976 = vsel %vm965, %v958, 0
          %vm978 = vcmask 1043456
          %v980 = vsel %vm978, %v963, 0
          %v983 = vsel %vm978, %v964, 0
          %985 = vmatprep.subr.bf16.mxu0 %v983
          %986 = vmatpush1.bf16.msra.mxu0 %v980
          %987 = vmatprep.subr.bf16.mxu0 0
          %988 = vmatpush1.bf16.msra.mxu0 0
          %989 = vmatprep.subr.bf16.mxu0 0
          %990 = vmatpush1.bf16.msra.mxu0 0
          %991 = vmatprep.subr.bf16.mxu0 0
          %992 = vmatpush1.bf16.msra.mxu0 0
          %993 = vmatprep.subr.bf16.mxu0 0
          %994 = vmatpush1.bf16.msra.mxu0 0
          %995 = vmatprep.subr.bf16.mxu0 0
          %996 = vmatpush1.bf16.msra.mxu0 0
          %997 = vmatprep.subr.bf16.mxu0 0
          %998 = vmatpush1.bf16.msra.mxu0 0
          %999 = vmatprep.subr.bf16.mxu0 0
          %1000 = vmatpush1.bf16.msra.mxu0 0
          %1001 = vmatprep.subr.bf16.mxu0 0
          %1002 = vmatpush1.bf16.msra.mxu0 0
          %1003 = vmatprep.subr.bf16.mxu0 0
          %1004 = vmatpush1.bf16.msra.mxu0 0
          %1005 = vmatprep.subr.bf16.mxu0 0
          %1006 = vmatpush1.bf16.msra.mxu0 0
          %1007 = vmatprep.subr.bf16.mxu0 0
          %1008 = vmatpush1.bf16.msra.mxu0 0
          %1009 = vmatprep.subr.bf16.mxu0 0
          %1010 = vmatpush1.bf16.msra.mxu0 0
          %1011 = vmatprep.subr.bf16.mxu0 0
          %1012 = vmatpush1.bf16.msra.mxu0 0
          %1013 = vmatprep.subr.bf16.mxu0 0
          %1014 = vmatpush1.bf16.msra.mxu0 0
          %1015 = vmatprep.subr.bf16.mxu0 0
          %1016 = vmatpush1.bf16.msra.mxu0 0
          %1017 = vmatprep.mubr.bf16.mxu0 0
          %1018 = vmatmul.mubr.bf16.gmra.mrb[0].mxu0 %v967
          %v1019 = vpop.f32.mrb[0].mxu0
          %v1020 = vadd.f32 0.0, %v1019
          %v1021 = vpop.f32.mrb[0].mxu0
          %v1022 = vadd.f32 0.0, %v1021
          %v1023 = vpop.f32.mrb[0].mxu0
          %v1024 = vadd.f32 0.0, %v1023
          %v1025 = vpop.f32.mrb[0].mxu0
          %v1026 = vadd.f32 0.0, %v1025
          %1027 = vmatprep.mubr.bf16.mxu0 0
          %1028 = vmatmul.mubr.bf16.gmra.mrb[0].mxu0 %v970
          %v1029 = vpop.f32.mrb[0].mxu0
          %v1030 = vadd.f32 0.0, %v1029
          %v1031 = vpop.f32.mrb[0].mxu0
          %v1032 = vadd.f32 0.0, %v1031
          %v1033 = vpop.f32.mrb[0].mxu0
          %v1034 = vadd.f32 0.0, %v1033
          %v1035 = vpop.f32.mrb[0].mxu0
          %v1036 = vadd.f32 0.0, %v1035
          %1037 = vmatprep.mubr.bf16.mxu0 0
          %1038 = vmatmul.mubr.bf16.gmra.mrb[0].mxu0 %v973
          %v1039 = vpop.f32.mrb[0].mxu0
          %v1040 = vadd.f32 0.0, %v1039
          %v1041 = vpop.f32.mrb[0].mxu0
          %v1042 = vadd.f32 0.0, %v1041
          %v1043 = vpop.f32.mrb[0].mxu0
          %v1044 = vadd.f32 0.0, %v1043
          %v1045 = vpop.f32.mrb[0].mxu0
          %v1046 = vadd.f32 0.0, %v1045
          %1047 = vmatprep.mubr.bf16.mxu0 0
          %1048 = vmatmul.mubr.bf16.gmra.mrb[0].mxu0 %v976
          %v1049 = vpop.f32.mrb[0].mxu0
          %v1050 = vadd.f32 0.0, %v1049
          %v1051 = vpop.f32.mrb[0].mxu0
          %v1052 = vadd.f32 0.0, %v1051
          %v1053 = vpop.f32.mrb[0].mxu0
          %v1054 = vadd.f32 0.0, %v1053
          %v1055 = vpop.f32.mrb[0].mxu0
          %v1056 = vadd.f32 0.0, %v1055
          %1057 = vdwg.mxu0
          %v1058 = vld [vmem:[#allocation2] sm:$0xff]
          %v1059 = vld [vmem:[#allocation2 + $0x8] sm:$0xff]
          %v1060 = vld [vmem:[#allocation2 + $0x10] sm:$0xff]
          %v1061 = vld [vmem:[#allocation2 + $0x18] sm:$0xff]
          %v1062 = vld [vmem:[#allocation2 + $0x20] sm:$0xff]
          %v1063 = vld [vmem:[#allocation2 + $0x28] sm:$0xff]
          %v1064 = vld [vmem:[#allocation2 + $0x30] sm:$0xff]
          %v1065 = vld [vmem:[#allocation2 + $0x38] sm:$0xff]
          %v1066 = vld [vmem:[#allocation2 + $0x40] sm:$0xff]
          %v1067 = vld [vmem:[#allocation2 + $0x48] sm:$0xff]
          %v1068 = vld [vmem:[#allocation2 + $0x50] sm:$0xff]
          %v1069 = vld [vmem:[#allocation2 + $0x58] sm:$0xff]
          %v1070 = vld [vmem:[#allocation2 + $0x60] sm:$0xff]
          %v1071 = vld [vmem:[#allocation2 + $0x68] sm:$0xff]
          %v1072 = vld [vmem:[#allocation2 + $0x70] sm:$0xff]
          %v1073 = vld [vmem:[#allocation2 + $0x78] sm:$0xff]
          %v1074 = vadd.f32 %v1058, %v1020
          %v1075 = vadd.f32 %v1059, %v1022
          %v1076 = vadd.f32 %v1060, %v1024
          %v1077 = vadd.f32 %v1061, %v1026
          %v1078 = vadd.f32 %v1062, %v1030
          %v1079 = vadd.f32 %v1063, %v1032
          %v1080 = vadd.f32 %v1064, %v1034
          %v1081 = vadd.f32 %v1065, %v1036
          %v1082 = vadd.f32 %v1066, %v1040
          %v1083 = vadd.f32 %v1067, %v1042
          %v1084 = vadd.f32 %v1068, %v1044
          %v1085 = vadd.f32 %v1069, %v1046
          %v1086 = vadd.f32 %v1070, %v1050
          %v1087 = vadd.f32 %v1071, %v1052
          %v1088 = vadd.f32 %v1072, %v1054
          %v1089 = vadd.f32 %v1073, %v1056
          %1090 = vst [vmem:[%s419] sm:$0xff] %v1074
          %1091 = vst [vmem:[%s419 + $0x8] sm:$0xff] %v1075
          %1092 = vst [vmem:[%s419 + $0x10] sm:$0xff] %v1076
          %1093 = vst [vmem:[%s419 + $0x18] sm:$0xff] %v1077
          %1094 = vst [vmem:[%s419 + $0x20] sm:$0xff] %v1078
          %1095 = vst [vmem:[%s419 + $0x28] sm:$0xff] %v1079
          %1096 = vst [vmem:[%s419 + $0x30] sm:$0xff] %v1080
          %1097 = vst [vmem:[%s419 + $0x38] sm:$0xff] %v1081
          %1098 = vst [vmem:[%s419 + $0x40] sm:$0xff] %v1082
          %1099 = vst [vmem:[%s419 + $0x48] sm:$0xff] %v1083
          %1100 = vst [vmem:[%s419 + $0x50] sm:$0xff] %v1084
          %1101 = vst [vmem:[%s419 + $0x58] sm:$0xff] %v1085
          %1102 = vst [vmem:[%s419 + $0x60] sm:$0xff] %v1086
          %1103 = vst [vmem:[%s419 + $0x68] sm:$0xff] %v1087
          %1104 = vst [vmem:[%s419 + $0x70] sm:$0xff] %v1088
          %1105 = vst [vmem:[%s419 + $0x78] sm:$0xff] %v1089
        $region72: #{tpu_custom_call.1} parent=39 // pred_fallthru
          _
        %s1106 = sand.u32 %s204, 1
        %s1107 = scalar_lea.sflag [#allocation8], %s1106
        %s1108 = sand.u32 %s204, 1
        %s1109 = smul.addr %s1108, 128
        %s1110 = scalar_lea.vmem [#allocation14], %s1109
        // Predicated region
        $region73: #{tpu_custom_call.1} parent=39 // pred_check
          %p1111 = pneg %p214
        $region74: #{tpu_custom_call.1} parent=39 // pred_check_branch
          %1113 = sbr.rel (%p1111) target = $region76
        $region75: #{tpu_custom_call.1} parent=39 // pred_region
          %s1114 = smul.u32 8, %s38
          %s1115 = smul.u32 2, %s39
          %s1117 = ssub.s32 2048, 2048
          %1118 = vsyncadd %s1107, %s1117
          %s1119 = smul.addr %s1114, 4
          %s1120 = sadd.s32 %s1115, %s1119
          %s1121 = smul.addr %s1120, 128
          %s1122 = scalar_lea.hbm %s6, %s1121
          %s1123 = sshll.u32 %s1110, 4
          %s1124 = int_to_ptr.vmem [resolvable:$true] %s1123
          %1129 = dma.vmem_to_hbm [thread:$0]  %s1124, 2048, %s1122, %s1107, 256, 512, 16
        $region76: #{tpu_custom_call.1} parent=39 // pred_fallthru
          _
      $region40: #{tpu_custom_call.1} parent=5 // pred_fallthru
        _
      %p1130 = scmp.le.s32.totalorder 2, %s28
      // Predicated region
      $region77: #{tpu_custom_call.1} parent=5 // pred_check
        %p1131 = pneg %p1130
      $region78: #{tpu_custom_call.1} parent=5 // pred_check_branch
        %1133 = sbr.rel (%p1131) target = $region80
      $region79: #{tpu_custom_call.1} parent=5 // pred_region
        %s1134 = ssub.s32 %s28, 2
        // Predicated region
        $region81: #{tpu_custom_call.1} parent=79 // pred_check
          %p1135 = pneg %p220
        $region82: #{tpu_custom_call.1} parent=79 // pred_check_branch
          %1137 = sbr.rel (%p1135) target = $region84
        $region83: #{tpu_custom_call.1} parent=79 // pred_region
          %s1138 = sand.u32 %s205, 1
          %s1139 = scalar_lea.sflag [#allocation8], %s1138
          %s1140 = sand.u32 %s205, 1
          %s1141 = smul.addr %s1140, 128
          %s1142 = scalar_lea.vmem [#allocation14], %s1141
          %1143 = dma.done %s1139, 2048
        $region84: #{tpu_custom_call.1} parent=79 // pred_fallthru
          _
      $region80: #{tpu_custom_call.1} parent=5 // pred_fallthru
        _
    $region6: #{tpu_custom_call.1} parent=1 // loop_footer
      %s32 = sadd.s32 1, %s28
    $region7: #{tpu_custom_call.1} parent=1 // loop_footer_branch
      %27 = sbr.rel target = $region3
    $region8: #{tpu_custom_call.1} parent=1 // loop_exit
      _
    %1144 = vsyncpa [#allocation7], 1
    %s1145 = scalar_lea.sflag [#allocation7], 1
    %1146 = vsyncpa %s1145, 1
    %1147 = vsyncpa [#allocation10], 1
    %s1148 = scalar_lea.sflag [#allocation10], 1
    %1149 = vsyncpa %s1148, 1
    %1150 = vsyncpa [#allocation13], 1
    %s1151 = scalar_lea.sflag [#allocation13], 1
    %1152 = vsyncpa %s1151, 1
    %1153 = vsyncpa [#allocation8], 1
    %s1154 = scalar_lea.sflag [#allocation8], 1
    %1155 = vsyncpa %s1154, 1

</llo_original>
